<compile_context>
chip_gen: v7x
topology: tpu7x:2x2x1
jax: 0.10.0
libtpu: 0.0.40
codegen_flags: <defaults>
</compile_context>

<pallas_src>
import functools
import math

import jax
import jax.numpy as jnp
from jax.experimental import pallas as pl
from jax.experimental.pallas import tpu as pltpu

_LANES = 128
_SUBLANES = 8
_ROW_ALIGN = 32  # multiple of the sublane packing for f32 (8), bf16 (16), int8/fp8 (32)


def _mse_partial_kernel(p_ref, g_ref, acc_ref, *, rows_valid, tile_rows, steps_per_core):
    """Accumulate per-(sublane, lane) partial sums of (p - g)^2 into acc_ref."""
    c = pl.program_id(0)   # core-split axis ("parallel")
    i = pl.program_id(1)   # row-tile reduction axis ("arbitrary")

    # acc_ref is this core's resident (8, 128) output slab (same block index for all i).
    @pl.when(i == 0)
    def _():
        acc_ref[...] = jnp.zeros_like(acc_ref)

    # Intended global starting row of this tile (the DMA'd block index is clamped in
    # the index_map; correctness comes from this mask, computed from the intent).
    start_row = (c * steps_per_core + i) * tile_rows

    d = p_ref[...].astype(jnp.float32) - g_ref[...].astype(jnp.float32)  # (tile_rows, 128)
    row_ids = jax.lax.broadcasted_iota(jnp.int32, (tile_rows, 1), 0) + start_row
    d = jnp.where(row_ids < rows_valid, d, 0.0)   # mask rows past the end (select, VPU)
    sq = d * d

    # Fold rows into an (8, 128) partial sum. The reshape splits on (8,128) tile
    # boundaries (layout preserving) and the axis-0 sum is pure VPU adds (no XLU).
    acc_ref[...] += jnp.sum(sq.reshape(tile_rows // _SUBLANES, _SUBLANES, _LANES), axis=0)


def point_mse_pallas(pred_pts, gt_pts, *, block_rows=None, min_pallas_elements=1 << 15):
    """Mean squared error between two equal-shape arrays (== F.mse_loss, 'mean')."""
    if tuple(pred_pts.shape) != tuple(gt_pts.shape):
        raise ValueError(f"shape mismatch: {pred_pts.shape} vs {gt_pts.shape}")

    total = int(math.prod(pred_pts.shape))
    if total == 0:
        return jnp.array(jnp.nan, dtype=jnp.float32)  # matches torch's empty-input nan

    p = jnp.asarray(pred_pts).reshape(-1)   # free reshape, native dtype kept in HBM
    g = jnp.asarray(gt_pts).reshape(-1)
    inv_count = 1.0 / float(total)          # exact in double, applied once at the end

    # Fast path: tiny inputs (launch overhead dominates) or lane-ragged totals
    # (a pad would cost an extra full HBM read+write of both inputs; a single fused
    # XLA elementwise+reduce already reads each input exactly once).
    if total < min_pallas_elements or total % _LANES != 0:
        d = p.astype(jnp.float32) - g.astype(jnp.float32)
        return jnp.sum(d * d) * inv_count

    rows = total // _LANES
    itemsize = p.dtype.itemsize
    if block_rows is None:
        # ~2 MiB per input buffer (4 MiB for f32): amortizes per-step overhead while
        # 2 inputs x 2 pipeline buffers stay under v5e's 16 MiB default scoped VMEM.
        block_rows = 8192 if itemsize <= 2 else 4096
    tr = min(int(block_rows), pl.cdiv(rows, _ROW_ALIGN) * _ROW_ALIGN)
    tr = max(_ROW_ALIGN, (tr // _ROW_ALIGN) * _ROW_ALIGN)

    n_blocks = pl.cdiv(rows, tr)
    # 2-way core split (v7x megacore); serial no-op on single-core chips.
    n_cores = 2 if n_blocks >= 2 else 1
    steps_per_core = pl.cdiv(n_blocks, n_cores)
    last_block = n_blocks - 1

    p2 = p.reshape(rows, _LANES)   # free: total % 128 == 0 on this path
    g2 = g.reshape(rows, _LANES)

    def in_index(c, i):
        b = c * steps_per_core + i
        return (jnp.minimum(b, last_block), 0)   # clamp; mask in-kernel makes extras no-ops

    kernel = functools.partial(
        _mse_partial_kernel,
        rows_valid=rows,
        tile_rows=tr,
        steps_per_core=steps_per_core,
    )

    partials = pl.pallas_call(
        kernel,
        out_shape=jax.ShapeDtypeStruct((n_cores, _SUBLANES, _LANES), jnp.float32),
        grid_spec=pltpu.PrefetchScalarGridSpec(
            num_scalar_prefetch=0,
            grid=(n_cores, steps_per_core),
            in_specs=[
                pl.BlockSpec((tr, _LANES), in_index),
                pl.BlockSpec((tr, _LANES), in_index),
            ],
            # One resident (8,128) accumulator slab per core.
            out_specs=pl.BlockSpec((None, _SUBLANES, _LANES), lambda c, i: (c, 0, 0)),
        ),
        compiler_params=pltpu.CompilerParams(
            dimension_semantics=("parallel", "arbitrary"),
        ),
        cost_estimate=pl.CostEstimate(
            flops=3 * total,
            transcendentals=0,
            bytes_accessed=2 * total * itemsize + n_cores * _SUBLANES * _LANES * 4,
        ),
    )(p2, g2)

    # Tiny glue: reduce at most 2*8*128 partials and apply the mean.
    return jnp.sum(partials) * inv_count


class PointMSE:
    """JAX/Pallas equivalent of the PyTorch PointMSE module (no parameters)."""

    def __init__(self):
        pass

    def __call__(self, pred_pts, gt_pts, **kwargs):
        return point_mse_pallas(pred_pts, gt_pts)


if __name__ == "__main__":
    key = jax.random.PRNGKey(0)
    k1, k2, k3, k4 = jax.random.split(key, 4)
    loss_fn = PointMSE()

    # 1) Tiny point cloud (B=2, N=128, D=3): small-input fast path.
    p_small = jax.random.uniform(k1, (2, 128, 3), dtype=jnp.float32)
    g_small = jax.random.uniform(k2, (2, 128, 3), dtype=jnp.float32)
    out_small = loss_fn(p_small, g_small)
    ref_small = jnp.mean((p_small - g_small) ** 2)
    assert jnp.allclose(out_small, ref_small, rtol=1e-6, atol=1e-6), (out_small, ref_small)

    # 2) Pallas path, default tiling (single row-tile).
    p_med = jax.random.uniform(k3, (2, 2048, 16), dtype=jnp.float32)
    g_med = jax.random.uniform(k4, (2, 2048, 16), dtype=jnp.float32)
    out_med = point_mse_pallas(p_med, g_med)
    ref_med = jnp.mean((p_med - g_med) ** 2)
    assert jnp.allclose(out_med, ref_med, rtol=1e-5, atol=1e-6), (out_med, ref_med)

    # 3) Pallas path with many row-tiles, a ragged last tile and the 2-way core split
    #    (block_rows forced small so the machinery is exercised at a small shape).
    p_rag = jax.random.uniform(k1, (2, 520, 64), dtype=jnp.float32)
    g_rag = jax.random.uniform(k2, (2, 520, 64), dtype=jnp.float32)
    out_rag = point_mse_pallas(p_rag, g_rag, block_rows=64)
    ref_rag = jnp.mean((p_rag - g_rag) ** 2)
    assert jnp.allclose(out_rag, ref_rag, rtol=1e-5, atol=1e-6), (out_rag, ref_rag)

    # 4) bf16 inputs stay bf16 in HBM; the f32 upcast happens inside the kernel.
    p_bf = p_rag.astype(jnp.bfloat16)
    g_bf = g_rag.astype(jnp.bfloat16)
    out_bf = point_mse_pallas(p_bf, g_bf, block_rows=64)
    ref_bf = jnp.mean((p_bf.astype(jnp.float32) - g_bf.astype(jnp.float32)) ** 2)
    assert jnp.allclose(out_bf, ref_bf, rtol=1e-5, atol=1e-6), (out_bf, ref_bf)

    jax.block_until_ready((out_small, out_med, out_rag, out_bf))
    print("KERNEL_OK")
</pallas_src>

<mosaic_0001>
module attributes {stable_mosaic.version = 11 : i64} {
  func.func @_mse_partial_kernel(%arg0: i32, %arg1: i32, %arg2: memref<512x128xf32, #tpu.memory_space<vmem>>, %arg3: memref<512x128xf32, #tpu.memory_space<vmem>>, %arg4: memref<1x8x128xf32, #tpu.memory_space<vmem>>) attributes {dimension_semantics = [#tpu.dimension_semantics<parallel>, #tpu.dimension_semantics<arbitrary>], iteration_bounds = array<i64: 1, 1>, scalar_prefetch = 0 : i64, scratch_operands = 0 : i64, tpu.core_type = #tpu.core_type<tc>, window_params = [{transform_indices = @transform_0, window_bounds = array<i64: 512, 128>}, {transform_indices = @transform_1, window_bounds = array<i64: 512, 128>}, {transform_indices = @transform_2, window_bounds = array<i64: 1, 8, 128>}]} {
    %c0_i32 = arith.constant 0 : i32
    %0 = arith.cmpi eq, %arg1, %c0_i32 : i32
    %1 = arith.extui %0 : i1 to i32
    %c0_i32_0 = arith.constant 0 : i32
    %2 = arith.cmpi ne, %1, %c0_i32_0 : i32
    scf.if %2 {
      %cst_12 = arith.constant 0.000000e+00 : f32
      %27 = vector.broadcast %cst_12 : f32 to vector<8x128xf32>
      %c0_13 = arith.constant 0 : index
      %c0_14 = arith.constant 0 : index
      %c0_15 = arith.constant 0 : index
      %28 = vector.load %arg4[%c0_13, %c0_14, %c0_15] : memref<1x8x128xf32, #tpu.memory_space<vmem>>, vector<1x8x128xf32>
      %29 = vector.shape_cast %28 : vector<1x8x128xf32> to vector<8x128xf32>
      %30 = vector.shape_cast %27 : vector<8x128xf32> to vector<1x8x128xf32>
      tpu.vector_store %arg4[%c0_13, %c0_14, %c0_15], %30 {strides = array<i32>} : memref<1x8x128xf32, #tpu.memory_space<vmem>>, vector<1x8x128xf32>,
    } else {
    }
    %c1_i32 = arith.constant 1 : i32
    %3 = arith.muli %arg0, %c1_i32 : i32
    %4 = arith.addi %3, %arg1 : i32
    %c512_i32 = arith.constant 512 : i32
    %5 = arith.muli %4, %c512_i32 : i32
    %c0 = arith.constant 0 : index
    %c0_1 = arith.constant 0 : index
    %6 = vector.load %arg2[%c0, %c0_1] : memref<512x128xf32, #tpu.memory_space<vmem>>, vector<512x128xf32>
    %c0_2 = arith.constant 0 : index
    %c0_3 = arith.constant 0 : index
    %7 = vector.load %arg3[%c0_2, %c0_3] : memref<512x128xf32, #tpu.memory_space<vmem>>, vector<512x128xf32>
    %8 = arith.subf %6, %7 : vector<512x128xf32>
    %9 = tpu.iota {dimensions = array<i32: 0>} : vector<512x1xi32>
    %10 = vector.broadcast %5 : i32 to vector<512x1xi32>
    %11 = arith.addi %9, %10 : vector<512x1xi32>
    %c512_i32_4 = arith.constant 512 : i32
    %12 = vector.broadcast %c512_i32_4 : i32 to vector<512x1xi32>
    %13 = arith.cmpi slt, %11, %12 : vector<512x1xi32>
    %cst = arith.constant 0.000000e+00 : f32
    %14 = vector.shape_cast %13 : vector<512x1xi1> to vector<512x1xi1>
    %15 = vector.broadcast %14 : vector<512x1xi1> to vector<512x128xi1>
    %16 = vector.broadcast %cst : f32 to vector<512x128xf32>
    %17 = arith.select %15, %8, %16 : vector<512x128xi1>, vector<512x128xf32>
    %18 = arith.mulf %17, %17 : vector<512x128xf32>
    %c0_5 = arith.constant 0 : index
    %c0_6 = arith.constant 0 : index
    %c0_7 = arith.constant 0 : index
    %19 = vector.load %arg4[%c0_5, %c0_6, %c0_7] : memref<1x8x128xf32, #tpu.memory_space<vmem>>, vector<1x8x128xf32>
    %20 = vector.shape_cast %19 : vector<1x8x128xf32> to vector<8x128xf32>
    %21 = vector.shape_cast %18 : vector<512x128xf32> to vector<64x8x128xf32>
    %cst_8 = arith.constant dense<0.000000e+00> : vector<8x128xf32>
    %22 = vector.multi_reduction <add>, %21, %cst_8 [0] : vector<64x8x128xf32> to vector<8x128xf32>
    %23 = arith.addf %20, %22 : vector<8x128xf32>
    %c0_9 = arith.constant 0 : index
    %c0_10 = arith.constant 0 : index
    %c0_11 = arith.constant 0 : index
    %24 = vector.load %arg4[%c0_9, %c0_10, %c0_11] : memref<1x8x128xf32, #tpu.memory_space<vmem>>, vector<1x8x128xf32>
    %25 = vector.shape_cast %24 : vector<1x8x128xf32> to vector<8x128xf32>
    %26 = vector.shape_cast %23 : vector<8x128xf32> to vector<1x8x128xf32>
    tpu.vector_store %arg4[%c0_9, %c0_10, %c0_11], %26 {strides = array<i32>} : memref<1x8x128xf32, #tpu.memory_space<vmem>>, vector<1x8x128xf32>,
    return
  }
  func.func @transform_0(%arg0: i32, %arg1: i32) -> (i32, i32) {
    %c1_i32 = arith.constant 1 : i32
    %0 = arith.muli %arg0, %c1_i32 : i32
    %1 = arith.addi %0, %arg1 : i32
    %c0_i32 = arith.constant 0 : i32
    %2 = arith.minsi %1, %c0_i32 : i32
    %c0_i32_0 = arith.constant 0 : i32
    %c0_i32_1 = arith.constant 0 : i32
    return %2, %c0_i32_0 : i32, i32
  }
  func.func @transform_1(%arg0: i32, %arg1: i32) -> (i32, i32) {
    %c1_i32 = arith.constant 1 : i32
    %0 = arith.muli %arg0, %c1_i32 : i32
    %1 = arith.addi %0, %arg1 : i32
    %c0_i32 = arith.constant 0 : i32
    %2 = arith.minsi %1, %c0_i32 : i32
    %c0_i32_0 = arith.constant 0 : i32
    %c0_i32_1 = arith.constant 0 : i32
    return %2, %c0_i32_0 : i32, i32
  }
  func.func @transform_2(%arg0: i32, %arg1: i32) -> (i32, i32, i32) {
    %c0_i32 = arith.constant 0 : i32
    %c0_i32_0 = arith.constant 0 : i32
    %c0_i32_1 = arith.constant 0 : i32
    return %arg0, %c0_i32, %c0_i32_0 : i32, i32, i32
  }
}

</mosaic_0001>

<llo_original>
// kernel: tpu_custom_call.1
$region0: #{tpu_custom_call.1}
  #allocation0 [shape = 'u32[]', space=smem, size = 0x4, offset = 0x4, fixed_abs, tag = 'smem constant byte address 0x4 - core index']
  #allocation1 [shape = 'u32[144,128]{1,0:T(1,128)}', space=vmem, size = 0x12000, scoped, tag = 'internal scratch']
  %s0 = inlined_call_operand.hbm [shape: f32[512,128], index: 0, kind: input, shape index: {}]
  %s1 = inlined_call_operand.hbm [shape: f32[512,128], index: 1, kind: input, shape index: {}]
  %s2 = inlined_call_operand.hbm [shape: f32[1,8,128], index: 2, kind: output, shape index: {}]
  %s3 = sld [smem:[#allocation0]]
  $region30: #{tpu_custom_call.1} parent=0
    _
  %s5 = ssub.s32 1, %s3
  %s6 = scalar_select 0, %s5, %s3
  $region1: #{tpu_custom_call.1} parent=0
    #allocation2 [shape = 'u8[262144]{0}', space=vmem, size = 0x40000, scoped, tag = 'input window, operand 0, single buffered']
    #allocation3 [shape = 's32[1]{0}', space=sflag, size = 0x4, scoped, tag = 'scoped memory for tpu_custom_call.1']
    #allocation4 [shape = 's32[1]{0}', space=sflag, size = 0x4, scoped, tag = 'scoped memory for tpu_custom_call.1']
    #allocation5 [shape = 'u8[262144]{0}', space=vmem, size = 0x40000, scoped, tag = 'input window, operand 1, single buffered']
    #allocation6 [shape = 's32[1]{0}', space=sflag, size = 0x4, scoped, tag = 'scoped memory for tpu_custom_call.1']
    #allocation7 [shape = 'u8[4096]{0}', space=vmem, size = 0x1000, scoped, tag = 'output window, operand 0, single buffered']
    %7 = vsyncpa [#allocation3], 0
    %8 = vsyncpa [#allocation6], 0
    %9 = vsyncpa [#allocation4], 0
    // Predicated region
    $region2: #{tpu_custom_call.1} parent=1 // pred_check
      _
    $region3: #{tpu_custom_call.1} parent=1 // pred_check_branch
      %11 = sbr.rel (0) target = $region5
    $region4: #{tpu_custom_call.1} parent=1 // pred_region
      %s12 = sadd.s32 0, 0
      %p13 = scmp.lt.s32.totalorder %s12, 0
      %s14 = scalar_select %p13, %s12, 0
      %s15 = smul.u32 64, %s14
      %s17 = ssub.s32 8192, 8192
      %18 = vsyncadd [#allocation3], %s17
      %s19 = smul.addr %s15, 128
      %s20 = scalar_lea.hbm %s0, %s19
      %s21 = sshll.u32 [#allocation2], 4
      %s22 = int_to_ptr.vmem [resolvable:$true] %s21
      %27 = dma.hbm_to_vmem [thread:$0]  %s20, 8192, %s22, [#allocation3], 128, 128, 8
    $region5: #{tpu_custom_call.1} parent=1 // pred_fallthru
      _
    // Predicated region
    $region6: #{tpu_custom_call.1} parent=1 // pred_check
      _
    $region7: #{tpu_custom_call.1} parent=1 // pred_check_branch
      %29 = sbr.rel (0) target = $region9
    $region8: #{tpu_custom_call.1} parent=1 // pred_region
      %s30 = sadd.s32 0, 0
      %p31 = scmp.lt.s32.totalorder %s30, 0
      %s32 = scalar_select %p31, %s30, 0
      %s33 = smul.u32 64, %s32
      %s35 = ssub.s32 8192, 8192
      %36 = vsyncadd [#allocation6], %s35
      %s37 = smul.addr %s33, 128
      %s38 = scalar_lea.hbm %s1, %s37
      %s39 = sshll.u32 [#allocation5], 4
      %s40 = int_to_ptr.vmem [resolvable:$true] %s39
      %45 = dma.hbm_to_vmem [thread:$0]  %s38, 8192, %s40, [#allocation6], 128, 128, 8
    $region9: #{tpu_custom_call.1} parent=1 // pred_fallthru
      _
    // Predicated region
    $region10: #{tpu_custom_call.1} parent=1 // pred_check
      _
    $region11: #{tpu_custom_call.1} parent=1 // pred_check_branch
      %47 = sbr.rel (0) target = $region13
    $region12: #{tpu_custom_call.1} parent=1 // pred_region
      %48 = dma.done [#allocation3], 8192
    $region13: #{tpu_custom_call.1} parent=1 // pred_fallthru
      _
    // Predicated region
    $region14: #{tpu_custom_call.1} parent=1 // pred_check
      _
    $region15: #{tpu_custom_call.1} parent=1 // pred_check_branch
      %50 = sbr.rel (0) target = $region17
    $region16: #{tpu_custom_call.1} parent=1 // pred_region
      %51 = dma.done [#allocation6], 8192
    $region17: #{tpu_custom_call.1} parent=1 // pred_fallthru
      _
    %s52 = sadd.s32 0, 0
    %p53 = scmp.lt.s32.totalorder %s52, 0
    %s54 = scalar_select %p53, %s52, 0
    %s55 = smul.u32 64, %s54
    %s56 = sadd.s32 0, 0
    %p57 = scmp.lt.s32.totalorder %s56, 0
    %s58 = scalar_select %p57, %s56, 0
    %s59 = smul.u32 64, %s58
    %p60 = scmp.eq.s32.totalorder 0, 0
    // Predicated region
    $region18: #{tpu_custom_call.1} parent=1 // pred_check
      %p61 = pneg %p60
    $region19: #{tpu_custom_call.1} parent=1 // pred_check_branch
      %63 = sbr.rel (%p61) target = $region21
    $region20: #{tpu_custom_call.1} parent=1 // pred_region
      %64 = vst [vmem:[#allocation7] sm:$0xff] 0.0
    $region21: #{tpu_custom_call.1} parent=1 // pred_fallthru
      _
    %s65 = sadd.s32 0, 0
    %s66 = smul.u32 %s65, 512
    %v67 = vld [vmem:[#allocation2] sm:$0xff]
    %v68 = vld [vmem:[#allocation2 + $0x8] sm:$0xff]
    %v69 = vld [vmem:[#allocation2 + $0x10] sm:$0xff]
    %v70 = vld [vmem:[#allocation2 + $0x18] sm:$0xff]
    %v71 = vld [vmem:[#allocation2 + $0x20] sm:$0xff]
    %v72 = vld [vmem:[#allocation2 + $0x28] sm:$0xff]
    %v73 = vld [vmem:[#allocation2 + $0x30] sm:$0xff]
    %v74 = vld [vmem:[#allocation2 + $0x38] sm:$0xff]
    %v75 = vld [vmem:[#allocation2 + $0x40] sm:$0xff]
    %v76 = vld [vmem:[#allocation2 + $0x48] sm:$0xff]
    %v77 = vld [vmem:[#allocation2 + $0x50] sm:$0xff]
    %v78 = vld [vmem:[#allocation2 + $0x58] sm:$0xff]
    %v79 = vld [vmem:[#allocation2 + $0x60] sm:$0xff]
    %v80 = vld [vmem:[#allocation2 + $0x68] sm:$0xff]
    %v81 = vld [vmem:[#allocation2 + $0x70] sm:$0xff]
    %v82 = vld [vmem:[#allocation2 + $0x78] sm:$0xff]
    %v83 = vld [vmem:[#allocation2 + $0x80] sm:$0xff]
    %v84 = vld [vmem:[#allocation2 + $0x88] sm:$0xff]
    %v85 = vld [vmem:[#allocation2 + $0x90] sm:$0xff]
    %v86 = vld [vmem:[#allocation2 + $0x98] sm:$0xff]
    %v87 = vld [vmem:[#allocation2 + $0xa0] sm:$0xff]
    %v88 = vld [vmem:[#allocation2 + $0xa8] sm:$0xff]
    %v89 = vld [vmem:[#allocation2 + $0xb0] sm:$0xff]
    %v90 = vld [vmem:[#allocation2 + $0xb8] sm:$0xff]
    %v91 = vld [vmem:[#allocation2 + $0xc0] sm:$0xff]
    %v92 = vld [vmem:[#allocation2 + $0xc8] sm:$0xff]
    %v93 = vld [vmem:[#allocation2 + $0xd0] sm:$0xff]
    %v94 = vld [vmem:[#allocation2 + $0xd8] sm:$0xff]
    %v95 = vld [vmem:[#allocation2 + $0xe0] sm:$0xff]
    %v96 = vld [vmem:[#allocation2 + $0xe8] sm:$0xff]
    %v97 = vld [vmem:[#allocation2 + $0xf0] sm:$0xff]
    %v98 = vld [vmem:[#allocation2 + $0xf8] sm:$0xff]
    %v99 = vld [vmem:[#allocation2 + $0x100] sm:$0xff]
    %v100 = vld [vmem:[#allocation2 + $0x108] sm:$0xff]
    %v101 = vld [vmem:[#allocation2 + $0x110] sm:$0xff]
    %v102 = vld [vmem:[#allocation2 + $0x118] sm:$0xff]
    %v103 = vld [vmem:[#allocation2 + $0x120] sm:$0xff]
    %v104 = vld [vmem:[#allocation2 + $0x128] sm:$0xff]
    %v105 = vld [vmem:[#allocation2 + $0x130] sm:$0xff]
    %v106 = vld [vmem:[#allocation2 + $0x138] sm:$0xff]
    %v107 = vld [vmem:[#allocation2 + $0x140] sm:$0xff]
    %v108 = vld [vmem:[#allocation2 + $0x148] sm:$0xff]
    %v109 = vld [vmem:[#allocation2 + $0x150] sm:$0xff]
    %v110 = vld [vmem:[#allocation2 + $0x158] sm:$0xff]
    %v111 = vld [vmem:[#allocation2 + $0x160] sm:$0xff]
    %v112 = vld [vmem:[#allocation2 + $0x168] sm:$0xff]
    %v113 = vld [vmem:[#allocation2 + $0x170] sm:$0xff]
    %v114 = vld [vmem:[#allocation2 + $0x178] sm:$0xff]
    %v115 = vld [vmem:[#allocation2 + $0x180] sm:$0xff]
    %v116 = vld [vmem:[#allocation2 + $0x188] sm:$0xff]
    %v117 = vld [vmem:[#allocation2 + $0x190] sm:$0xff]
    %v118 = vld [vmem:[#allocation2 + $0x198] sm:$0xff]
    %v119 = vld [vmem:[#allocation2 + $0x1a0] sm:$0xff]
    %v120 = vld [vmem:[#allocation2 + $0x1a8] sm:$0xff]
    %v121 = vld [vmem:[#allocation2 + $0x1b0] sm:$0xff]
    %v122 = vld [vmem:[#allocation2 + $0x1b8] sm:$0xff]
    %v123 = vld [vmem:[#allocation2 + $0x1c0] sm:$0xff]
    %v124 = vld [vmem:[#allocation2 + $0x1c8] sm:$0xff]
    %v125 = vld [vmem:[#allocation2 + $0x1d0] sm:$0xff]
    %v126 = vld [vmem:[#allocation2 + $0x1d8] sm:$0xff]
    %v127 = vld [vmem:[#allocation2 + $0x1e0] sm:$0xff]
    %v128 = vld [vmem:[#allocation2 + $0x1e8] sm:$0xff]
    %v129 = vld [vmem:[#allocation2 + $0x1f0] sm:$0xff]
    %v130 = vld [vmem:[#allocation2 + $0x1f8] sm:$0xff]
    %v131 = vld [vmem:[#allocation5] sm:$0xff]
    %v132 = vld [vmem:[#allocation5 + $0x8] sm:$0xff]
    %v133 = vld [vmem:[#allocation5 + $0x10] sm:$0xff]
    %v134 = vld [vmem:[#allocation5 + $0x18] sm:$0xff]
    %v135 = vld [vmem:[#allocation5 + $0x20] sm:$0xff]
    %v136 = vld [vmem:[#allocation5 + $0x28] sm:$0xff]
    %v137 = vld [vmem:[#allocation5 + $0x30] sm:$0xff]
    %v138 = vld [vmem:[#allocation5 + $0x38] sm:$0xff]
    %v139 = vld [vmem:[#allocation5 + $0x40] sm:$0xff]
    %v140 = vld [vmem:[#allocation5 + $0x48] sm:$0xff]
    %v141 = vld [vmem:[#allocation5 + $0x50] sm:$0xff]
    %v142 = vld [vmem:[#allocation5 + $0x58] sm:$0xff]
    %v143 = vld [vmem:[#allocation5 + $0x60] sm:$0xff]
    %v144 = vld [vmem:[#allocation5 + $0x68] sm:$0xff]
    %v145 = vld [vmem:[#allocation5 + $0x70] sm:$0xff]
    %v146 = vld [vmem:[#allocation5 + $0x78] sm:$0xff]
    %v147 = vld [vmem:[#allocation5 + $0x80] sm:$0xff]
    %v148 = vld [vmem:[#allocation5 + $0x88] sm:$0xff]
    %v149 = vld [vmem:[#allocation5 + $0x90] sm:$0xff]
    %v150 = vld [vmem:[#allocation5 + $0x98] sm:$0xff]
    %v151 = vld [vmem:[#allocation5 + $0xa0] sm:$0xff]
    %v152 = vld [vmem:[#allocation5 + $0xa8] sm:$0xff]
    %v153 = vld [vmem:[#allocation5 + $0xb0] sm:$0xff]
    %v154 = vld [vmem:[#allocation5 + $0xb8] sm:$0xff]
    %v155 = vld [vmem:[#allocation5 + $0xc0] sm:$0xff]
    %v156 = vld [vmem:[#allocation5 + $0xc8] sm:$0xff]
    %v157 = vld [vmem:[#allocation5 + $0xd0] sm:$0xff]
    %v158 = vld [vmem:[#allocation5 + $0xd8] sm:$0xff]
    %v159 = vld [vmem:[#allocation5 + $0xe0] sm:$0xff]
    %v160 = vld [vmem:[#allocation5 + $0xe8] sm:$0xff]
    %v161 = vld [vmem:[#allocation5 + $0xf0] sm:$0xff]
    %v162 = vld [vmem:[#allocation5 + $0xf8] sm:$0xff]
    %v163 = vld [vmem:[#allocation5 + $0x100] sm:$0xff]
    %v164 = vld [vmem:[#allocation5 + $0x108] sm:$0xff]
    %v165 = vld [vmem:[#allocation5 + $0x110] sm:$0xff]
    %v166 = vld [vmem:[#allocation5 + $0x118] sm:$0xff]
    %v167 = vld [vmem:[#allocation5 + $0x120] sm:$0xff]
    %v168 = vld [vmem:[#allocation5 + $0x128] sm:$0xff]
    %v169 = vld [vmem:[#allocation5 + $0x130] sm:$0xff]
    %v170 = vld [vmem:[#allocation5 + $0x138] sm:$0xff]
    %v171 = vld [vmem:[#allocation5 + $0x140] sm:$0xff]
    %v172 = vld [vmem:[#allocation5 + $0x148] sm:$0xff]
    %v173 = vld [vmem:[#allocation5 + $0x150] sm:$0xff]
    %v174 = vld [vmem:[#allocation5 + $0x158] sm:$0xff]
    %v175 = vld [vmem:[#allocation5 + $0x160] sm:$0xff]
    %v176 = vld [vmem:[#allocation5 + $0x168] sm:$0xff]
    %v177 = vld [vmem:[#allocation5 + $0x170] sm:$0xff]
    %v178 = vld [vmem:[#allocation5 + $0x178] sm:$0xff]
    %v179 = vld [vmem:[#allocation5 + $0x180] sm:$0xff]
    %v180 = vld [vmem:[#allocation5 + $0x188] sm:$0xff]
    %v181 = vld [vmem:[#allocation5 + $0x190] sm:$0xff]
    %v182 = vld [vmem:[#allocation5 + $0x198] sm:$0xff]
    %v183 = vld [vmem:[#allocation5 + $0x1a0] sm:$0xff]
    %v184 = vld [vmem:[#allocation5 + $0x1a8] sm:$0xff]
    %v185 = vld [vmem:[#allocation5 + $0x1b0] sm:$0xff]
    %v186 = vld [vmem:[#allocation5 + $0x1b8] sm:$0xff]
    %v187 = vld [vmem:[#allocation5 + $0x1c0] sm:$0xff]
    %v188 = vld [vmem:[#allocation5 + $0x1c8] sm:$0xff]
    %v189 = vld [vmem:[#allocation5 + $0x1d0] sm:$0xff]
    %v190 = vld [vmem:[#allocation5 + $0x1d8] sm:$0xff]
    %v191 = vld [vmem:[#allocation5 + $0x1e0] sm:$0xff]
    %v192 = vld [vmem:[#allocation5 + $0x1e8] sm:$0xff]
    %v193 = vld [vmem:[#allocation5 + $0x1f0] sm:$0xff]
    %v194 = vld [vmem:[#allocation5 + $0x1f8] sm:$0xff]
    %v195 = vsub.f32 %v67, %v131
    %v196 = vsub.f32 %v68, %v132
    %v197 = vsub.f32 %v69, %v133
    %v198 = vsub.f32 %v70, %v134
    %v199 = vsub.f32 %v71, %v135
    %v200 = vsub.f32 %v72, %v136
    %v201 = vsub.f32 %v73, %v137
    %v202 = vsub.f32 %v74, %v138
    %v203 = vsub.f32 %v75, %v139
    %v204 = vsub.f32 %v76, %v140
    %v205 = vsub.f32 %v77, %v141
    %v206 = vsub.f32 %v78, %v142
    %v207 = vsub.f32 %v79, %v143
    %v208 = vsub.f32 %v80, %v144
    %v209 = vsub.f32 %v81, %v145
    %v210 = vsub.f32 %v82, %v146
    %v211 = vsub.f32 %v83, %v147
    %v212 = vsub.f32 %v84, %v148
    %v213 = vsub.f32 %v85, %v149
    %v214 = vsub.f32 %v86, %v150
    %v215 = vsub.f32 %v87, %v151
    %v216 = vsub.f32 %v88, %v152
    %v217 = vsub.f32 %v89, %v153
    %v218 = vsub.f32 %v90, %v154
    %v219 = vsub.f32 %v91, %v155
    %v220 = vsub.f32 %v92, %v156
    %v221 = vsub.f32 %v93, %v157
    %v222 = vsub.f32 %v94, %v158
    %v223 = vsub.f32 %v95, %v159
    %v224 = vsub.f32 %v96, %v160
    %v225 = vsub.f32 %v97, %v161
    %v226 = vsub.f32 %v98, %v162
    %v227 = vsub.f32 %v99, %v163
    %v228 = vsub.f32 %v100, %v164
    %v229 = vsub.f32 %v101, %v165
    %v230 = vsub.f32 %v102, %v166
    %v231 = vsub.f32 %v103, %v167
    %v232 = vsub.f32 %v104, %v168
    %v233 = vsub.f32 %v105, %v169
    %v234 = vsub.f32 %v106, %v170
    %v235 = vsub.f32 %v107, %v171
    %v236 = vsub.f32 %v108, %v172
    %v237 = vsub.f32 %v109, %v173
    %v238 = vsub.f32 %v110, %v174
    %v239 = vsub.f32 %v111, %v175
    %v240 = vsub.f32 %v112, %v176
    %v241 = vsub.f32 %v113, %v177
    %v242 = vsub.f32 %v114, %v178
    %v243 = vsub.f32 %v115, %v179
    %v244 = vsub.f32 %v116, %v180
    %v245 = vsub.f32 %v117, %v181
    %v246 = vsub.f32 %v118, %v182
    %v247 = vsub.f32 %v119, %v183
    %v248 = vsub.f32 %v120, %v184
    %v249 = vsub.f32 %v121, %v185
    %v250 = vsub.f32 %v122, %v186
    %v251 = vsub.f32 %v123, %v187
    %v252 = vsub.f32 %v124, %v188
    %v253 = vsub.f32 %v125, %v189
    %v254 = vsub.f32 %v126, %v190
    %v255 = vsub.f32 %v127, %v191
    %v256 = vsub.f32 %v128, %v192
    %v257 = vsub.f32 %v129, %v193
    %v258 = vsub.f32 %v130, %v194
    %v259 = vlaneseq
    %v260 = vshrl.u32 %v259, 7
    %v261 = vadd.s32 %v260, 8
    %v262 = vadd.s32 %v260, 16
    %v263 = vadd.s32 %v260, 24
    %v264 = vadd.s32 %v260, 32
    %v265 = vadd.s32 %v260, 40
    %v266 = vadd.s32 %v260, 48
    %v267 = vadd.s32 %v260, 56
    %v268 = vadd.s32 %v260, 64
    %v269 = vadd.s32 %v260, 72
    %v270 = vadd.s32 %v260, 80
    %v271 = vadd.s32 %v260, 88
    %v272 = vadd.s32 %v260, 96
    %v273 = vadd.s32 %v260, 104
    %v274 = vadd.s32 %v260, 112
    %v275 = vadd.s32 %v260, 120
    %v276 = vadd.s32 %v260, 128
    %v277 = vadd.s32 %v260, 136
    %v278 = vadd.s32 %v260, 144
    %v279 = vadd.s32 %v260, 152
    %v280 = vadd.s32 %v260, 160
    %v281 = vadd.s32 %v260, 168
    %v282 = vadd.s32 %v260, 176
    %v283 = vadd.s32 %v260, 184
    %v284 = vadd.s32 %v260, 192
    %v285 = vadd.s32 %v260, 200
    %v286 = vadd.s32 %v260, 208
    %v287 = vadd.s32 %v260, 216
    %v288 = vadd.s32 %v260, 224
    %v289 = vadd.s32 %v260, 232
    %v290 = vadd.s32 %v260, 240
    %v291 = vadd.s32 %v260, 248
    %v292 = vadd.s32 %v260, 256
    %v293 = vadd.s32 %v260, 264
    %v294 = vadd.s32 %v260, 272
    %v295 = vadd.s32 %v260, 280
    %v296 = vadd.s32 %v260, 288
    %v297 = vadd.s32 %v260, 296
    %v298 = vadd.s32 %v260, 304
    %v299 = vadd.s32 %v260, 312
    %v300 = vadd.s32 %v260, 320
    %v301 = vadd.s32 %v260, 328
    %v302 = vadd.s32 %v260, 336
    %v303 = vadd.s32 %v260, 344
    %v304 = vadd.s32 %v260, 352
    %v305 = vadd.s32 %v260, 360
    %v306 = vadd.s32 %v260, 368
    %v307 = vadd.s32 %v260, 376
    %v308 = vadd.s32 %v260, 384
    %v309 = vadd.s32 %v260, 392
    %v310 = vadd.s32 %v260, 400
    %v311 = vadd.s32 %v260, 408
    %v312 = vadd.s32 %v260, 416
    %v313 = vadd.s32 %v260, 424
    %v314 = vadd.s32 %v260, 432
    %v315 = vadd.s32 %v260, 440
    %v316 = vadd.s32 %v260, 448
    %v317 = vadd.s32 %v260, 456
    %v318 = vadd.s32 %v260, 464
    %v319 = vadd.s32 %v260, 472
    %v320 = vadd.s32 %v260, 480
    %v321 = vadd.s32 %v260, 488
    %v322 = vadd.s32 %v260, 496
    %v323 = vadd.s32 %v260, 504
    %v324 = vstv %s66
    %v325 = vadd.s32 %v260, %v324
    %v326 = vadd.s32 %v261, %v324
    %v327 = vadd.s32 %v262, %v324
    %v328 = vadd.s32 %v263, %v324
    %v329 = vadd.s32 %v264, %v324
    %v330 = vadd.s32 %v265, %v324
    %v331 = vadd.s32 %v266, %v324
    %v332 = vadd.s32 %v267, %v324
    %v333 = vadd.s32 %v268, %v324
    %v334 = vadd.s32 %v269, %v324
    %v335 = vadd.s32 %v270, %v324
    %v336 = vadd.s32 %v271, %v324
    %v337 = vadd.s32 %v272, %v324
    %v338 = vadd.s32 %v273, %v324
    %v339 = vadd.s32 %v274, %v324
    %v340 = vadd.s32 %v275, %v324
    %v341 = vadd.s32 %v276, %v324
    %v342 = vadd.s32 %v277, %v324
    %v343 = vadd.s32 %v278, %v324
    %v344 = vadd.s32 %v279, %v324
    %v345 = vadd.s32 %v280, %v324
    %v346 = vadd.s32 %v281, %v324
    %v347 = vadd.s32 %v282, %v324
    %v348 = vadd.s32 %v283, %v324
    %v349 = vadd.s32 %v284, %v324
    %v350 = vadd.s32 %v285, %v324
    %v351 = vadd.s32 %v286, %v324
    %v352 = vadd.s32 %v287, %v324
    %v353 = vadd.s32 %v288, %v324
    %v354 = vadd.s32 %v289, %v324
    %v355 = vadd.s32 %v290, %v324
    %v356 = vadd.s32 %v291, %v324
    %v357 = vadd.s32 %v292, %v324
    %v358 = vadd.s32 %v293, %v324
    %v359 = vadd.s32 %v294, %v324
    %v360 = vadd.s32 %v295, %v324
    %v361 = vadd.s32 %v296, %v324
    %v362 = vadd.s32 %v297, %v324
    %v363 = vadd.s32 %v298, %v324
    %v364 = vadd.s32 %v299, %v324
    %v365 = vadd.s32 %v300, %v324
    %v366 = vadd.s32 %v301, %v324
    %v367 = vadd.s32 %v302, %v324
    %v368 = vadd.s32 %v303, %v324
    %v369 = vadd.s32 %v304, %v324
    %v370 = vadd.s32 %v305, %v324
    %v371 = vadd.s32 %v306, %v324
    %v372 = vadd.s32 %v307, %v324
    %v373 = vadd.s32 %v308, %v324
    %v374 = vadd.s32 %v309, %v324
    %v375 = vadd.s32 %v310, %v324
    %v376 = vadd.s32 %v311, %v324
    %v377 = vadd.s32 %v312, %v324
    %v378 = vadd.s32 %v313, %v324
    %v379 = vadd.s32 %v314, %v324
    %v380 = vadd.s32 %v315, %v324
    %v381 = vadd.s32 %v316, %v324
    %v382 = vadd.s32 %v317, %v324
    %v383 = vadd.s32 %v318, %v324
    %v384 = vadd.s32 %v319, %v324
    %v385 = vadd.s32 %v320, %v324
    %v386 = vadd.s32 %v321, %v324
    %v387 = vadd.s32 %v322, %v324
    %v388 = vadd.s32 %v323, %v324
    %vm389 = vcmp.lt.s32.totalorder %v325, 512
    %vm390 = vcmp.lt.s32.totalorder %v326, 512
    %vm391 = vcmp.lt.s32.totalorder %v327, 512
    %vm392 = vcmp.lt.s32.totalorder %v328, 512
    %vm393 = vcmp.lt.s32.totalorder %v329, 512
    %vm394 = vcmp.lt.s32.totalorder %v330, 512
    %vm395 = vcmp.lt.s32.totalorder %v331, 512
    %vm396 = vcmp.lt.s32.totalorder %v332, 512
    %vm397 = vcmp.lt.s32.totalorder %v333, 512
    %vm398 = vcmp.lt.s32.totalorder %v334, 512
    %vm399 = vcmp.lt.s32.totalorder %v335, 512
    %vm400 = vcmp.lt.s32.totalorder %v336, 512
    %vm401 = vcmp.lt.s32.totalorder %v337, 512
    %vm402 = vcmp.lt.s32.totalorder %v338, 512
    %vm403 = vcmp.lt.s32.totalorder %v339, 512
    %vm404 = vcmp.lt.s32.totalorder %v340, 512
    %vm405 = vcmp.lt.s32.totalorder %v341, 512
    %vm406 = vcmp.lt.s32.totalorder %v342, 512
    %vm407 = vcmp.lt.s32.totalorder %v343, 512
    %vm408 = vcmp.lt.s32.totalorder %v344, 512
    %vm409 = vcmp.lt.s32.totalorder %v345, 512
    %vm410 = vcmp.lt.s32.totalorder %v346, 512
    %vm411 = vcmp.lt.s32.totalorder %v347, 512
    %vm412 = vcmp.lt.s32.totalorder %v348, 512
    %vm413 = vcmp.lt.s32.totalorder %v349, 512
    %vm414 = vcmp.lt.s32.totalorder %v350, 512
    %vm415 = vcmp.lt.s32.totalorder %v351, 512
    %vm416 = vcmp.lt.s32.totalorder %v352, 512
    %vm417 = vcmp.lt.s32.totalorder %v353, 512
    %vm418 = vcmp.lt.s32.totalorder %v354, 512
    %vm419 = vcmp.lt.s32.totalorder %v355, 512
    %vm420 = vcmp.lt.s32.totalorder %v356, 512
    %vm421 = vcmp.lt.s32.totalorder %v357, 512
    %vm422 = vcmp.lt.s32.totalorder %v358, 512
    %vm423 = vcmp.lt.s32.totalorder %v359, 512
    %vm424 = vcmp.lt.s32.totalorder %v360, 512
    %vm425 = vcmp.lt.s32.totalorder %v361, 512
    %vm426 = vcmp.lt.s32.totalorder %v362, 512
    %vm427 = vcmp.lt.s32.totalorder %v363, 512
    %vm428 = vcmp.lt.s32.totalorder %v364, 512
    %vm429 = vcmp.lt.s32.totalorder %v365, 512
    %vm430 = vcmp.lt.s32.totalorder %v366, 512
    %vm431 = vcmp.lt.s32.totalorder %v367, 512
    %vm432 = vcmp.lt.s32.totalorder %v368, 512
    %vm433 = vcmp.lt.s32.totalorder %v369, 512
    %vm434 = vcmp.lt.s32.totalorder %v370, 512
    %vm435 = vcmp.lt.s32.totalorder %v371, 512
    %vm436 = vcmp.lt.s32.totalorder %v372, 512
    %vm437 = vcmp.lt.s32.totalorder %v373, 512
    %vm438 = vcmp.lt.s32.totalorder %v374, 512
    %vm439 = vcmp.lt.s32.totalorder %v375, 512
    %vm440 = vcmp.lt.s32.totalorder %v376, 512
    %vm441 = vcmp.lt.s32.totalorder %v377, 512
    %vm442 = vcmp.lt.s32.totalorder %v378, 512
    %vm443 = vcmp.lt.s32.totalorder %v379, 512
    %vm444 = vcmp.lt.s32.totalorder %v380, 512
    %vm445 = vcmp.lt.s32.totalorder %v381, 512
    %vm446 = vcmp.lt.s32.totalorder %v382, 512
    %vm447 = vcmp.lt.s32.totalorder %v383, 512
    %vm448 = vcmp.lt.s32.totalorder %v384, 512
    %vm449 = vcmp.lt.s32.totalorder %v385, 512
    %vm450 = vcmp.lt.s32.totalorder %v386, 512
    %vm451 = vcmp.lt.s32.totalorder %v387, 512
    %vm452 = vcmp.lt.s32.totalorder %v388, 512
    %v453 = vsel %vm389, 1, 0
    %v454 = vsel %vm390, 1, 0
    %v455 = vsel %vm391, 1, 0
    %v456 = vsel %vm392, 1, 0
    %v457 = vsel %vm393, 1, 0
    %v458 = vsel %vm394, 1, 0
    %v459 = vsel %vm395, 1, 0
    %v460 = vsel %vm396, 1, 0
    %v461 = vsel %vm397, 1, 0
    %v462 = vsel %vm398, 1, 0
    %v463 = vsel %vm399, 1, 0
    %v464 = vsel %vm400, 1, 0
    %v465 = vsel %vm401, 1, 0
    %v466 = vsel %vm402, 1, 0
    %v467 = vsel %vm403, 1, 0
    %v468 = vsel %vm404, 1, 0
    %v469 = vsel %vm405, 1, 0
    %v470 = vsel %vm406, 1, 0
    %v471 = vsel %vm407, 1, 0
    %v472 = vsel %vm408, 1, 0
    %v473 = vsel %vm409, 1, 0
    %v474 = vsel %vm410, 1, 0
    %v475 = vsel %vm411, 1, 0
    %v476 = vsel %vm412, 1, 0
    %v477 = vsel %vm413, 1, 0
    %v478 = vsel %vm414, 1, 0
    %v479 = vsel %vm415, 1, 0
    %v480 = vsel %vm416, 1, 0
    %v481 = vsel %vm417, 1, 0
    %v482 = vsel %vm418, 1, 0
    %v483 = vsel %vm419, 1, 0
    %v484 = vsel %vm420, 1, 0
    %v485 = vsel %vm421, 1, 0
    %v486 = vsel %vm422, 1, 0
    %v487 = vsel %vm423, 1, 0
    %v488 = vsel %vm424, 1, 0
    %v489 = vsel %vm425, 1, 0
    %v490 = vsel %vm426, 1, 0
    %v491 = vsel %vm427, 1, 0
    %v492 = vsel %vm428, 1, 0
    %v493 = vsel %vm429, 1, 0
    %v494 = vsel %vm430, 1, 0
    %v495 = vsel %vm431, 1, 0
    %v496 = vsel %vm432, 1, 0
    %v497 = vsel %vm433, 1, 0
    %v498 = vsel %vm434, 1, 0
    %v499 = vsel %vm435, 1, 0
    %v500 = vsel %vm436, 1, 0
    %v501 = vsel %vm437, 1, 0
    %v502 = vsel %vm438, 1, 0
    %v503 = vsel %vm439, 1, 0
    %v504 = vsel %vm440, 1, 0
    %v505 = vsel %vm441, 1, 0
    %v506 = vsel %vm442, 1, 0
    %v507 = vsel %vm443, 1, 0
    %v508 = vsel %vm444, 1, 0
    %v509 = vsel %vm445, 1, 0
    %v510 = vsel %vm446, 1, 0
    %v511 = vsel %vm447, 1, 0
    %v512 = vsel %vm448, 1, 0
    %v513 = vsel %vm449, 1, 0
    %v514 = vsel %vm450, 1, 0
    %v515 = vsel %vm451, 1, 0
    %v516 = vsel %vm452, 1, 0
    %vm517 = vcmp.eq.s32.totalorder %v453, 1
    %vm518 = vcmp.eq.s32.totalorder %v454, 1
    %vm519 = vcmp.eq.s32.totalorder %v455, 1
    %vm520 = vcmp.eq.s32.totalorder %v456, 1
    %vm521 = vcmp.eq.s32.totalorder %v457, 1
    %vm522 = vcmp.eq.s32.totalorder %v458, 1
    %vm523 = vcmp.eq.s32.totalorder %v459, 1
    %vm524 = vcmp.eq.s32.totalorder %v460, 1
    %vm525 = vcmp.eq.s32.totalorder %v461, 1
    %vm526 = vcmp.eq.s32.totalorder %v462, 1
    %vm527 = vcmp.eq.s32.totalorder %v463, 1
    %vm528 = vcmp.eq.s32.totalorder %v464, 1
    %vm529 = vcmp.eq.s32.totalorder %v465, 1
    %vm530 = vcmp.eq.s32.totalorder %v466, 1
    %vm531 = vcmp.eq.s32.totalorder %v467, 1
    %vm532 = vcmp.eq.s32.totalorder %v468, 1
    %vm533 = vcmp.eq.s32.totalorder %v469, 1
    %vm534 = vcmp.eq.s32.totalorder %v470, 1
    %vm535 = vcmp.eq.s32.totalorder %v471, 1
    %vm536 = vcmp.eq.s32.totalorder %v472, 1
    %vm537 = vcmp.eq.s32.totalorder %v473, 1
    %vm538 = vcmp.eq.s32.totalorder %v474, 1
    %vm539 = vcmp.eq.s32.totalorder %v475, 1
    %vm540 = vcmp.eq.s32.totalorder %v476, 1
    %vm541 = vcmp.eq.s32.totalorder %v477, 1
    %vm542 = vcmp.eq.s32.totalorder %v478, 1
    %vm543 = vcmp.eq.s32.totalorder %v479, 1
    %vm544 = vcmp.eq.s32.totalorder %v480, 1
    %vm545 = vcmp.eq.s32.totalorder %v481, 1
    %vm546 = vcmp.eq.s32.totalorder %v482, 1
    %vm547 = vcmp.eq.s32.totalorder %v483, 1
    %vm548 = vcmp.eq.s32.totalorder %v484, 1
    %vm549 = vcmp.eq.s32.totalorder %v485, 1
    %vm550 = vcmp.eq.s32.totalorder %v486, 1
    %vm551 = vcmp.eq.s32.totalorder %v487, 1
    %vm552 = vcmp.eq.s32.totalorder %v488, 1
    %vm553 = vcmp.eq.s32.totalorder %v489, 1
    %vm554 = vcmp.eq.s32.totalorder %v490, 1
    %vm555 = vcmp.eq.s32.totalorder %v491, 1
    %vm556 = vcmp.eq.s32.totalorder %v492, 1
    %vm557 = vcmp.eq.s32.totalorder %v493, 1
    %vm558 = vcmp.eq.s32.totalorder %v494, 1
    %vm559 = vcmp.eq.s32.totalorder %v495, 1
    %vm560 = vcmp.eq.s32.totalorder %v496, 1
    %vm561 = vcmp.eq.s32.totalorder %v497, 1
    %vm562 = vcmp.eq.s32.totalorder %v498, 1
    %vm563 = vcmp.eq.s32.totalorder %v499, 1
    %vm564 = vcmp.eq.s32.totalorder %v500, 1
    %vm565 = vcmp.eq.s32.totalorder %v501, 1
    %vm566 = vcmp.eq.s32.totalorder %v502, 1
    %vm567 = vcmp.eq.s32.totalorder %v503, 1
    %vm568 = vcmp.eq.s32.totalorder %v504, 1
    %vm569 = vcmp.eq.s32.totalorder %v505, 1
    %vm570 = vcmp.eq.s32.totalorder %v506, 1
    %vm571 = vcmp.eq.s32.totalorder %v507, 1
    %vm572 = vcmp.eq.s32.totalorder %v508, 1
    %vm573 = vcmp.eq.s32.totalorder %v509, 1
    %vm574 = vcmp.eq.s32.totalorder %v510, 1
    %vm575 = vcmp.eq.s32.totalorder %v511, 1
    %vm576 = vcmp.eq.s32.totalorder %v512, 1
    %vm577 = vcmp.eq.s32.totalorder %v513, 1
    %vm578 = vcmp.eq.s32.totalorder %v514, 1
    %vm579 = vcmp.eq.s32.totalorder %v515, 1
    %vm580 = vcmp.eq.s32.totalorder %v516, 1
    %v581 = vsel %vm517, %v195, 0.0
    %v582 = vsel %vm518, %v196, 0.0
    %v583 = vsel %vm519, %v197, 0.0
    %v584 = vsel %vm520, %v198, 0.0
    %v585 = vsel %vm521, %v199, 0.0
    %v586 = vsel %vm522, %v200, 0.0
    %v587 = vsel %vm523, %v201, 0.0
    %v588 = vsel %vm524, %v202, 0.0
    %v589 = vsel %vm525, %v203, 0.0
    %v590 = vsel %vm526, %v204, 0.0
    %v591 = vsel %vm527, %v205, 0.0
    %v592 = vsel %vm528, %v206, 0.0
    %v593 = vsel %vm529, %v207, 0.0
    %v594 = vsel %vm530, %v208, 0.0
    %v595 = vsel %vm531, %v209, 0.0
    %v596 = vsel %vm532, %v210, 0.0
    %v597 = vsel %vm533, %v211, 0.0
    %v598 = vsel %vm534, %v212, 0.0
    %v599 = vsel %vm535, %v213, 0.0
    %v600 = vsel %vm536, %v214, 0.0
    %v601 = vsel %vm537, %v215, 0.0
    %v602 = vsel %vm538, %v216, 0.0
    %v603 = vsel %vm539, %v217, 0.0
    %v604 = vsel %vm540, %v218, 0.0
    %v605 = vsel %vm541, %v219, 0.0
    %v606 = vsel %vm542, %v220, 0.0
    %v607 = vsel %vm543, %v221, 0.0
    %v608 = vsel %vm544, %v222, 0.0
    %v609 = vsel %vm545, %v223, 0.0
    %v610 = vsel %vm546, %v224, 0.0
    %v611 = vsel %vm547, %v225, 0.0
    %v612 = vsel %vm548, %v226, 0.0
    %v613 = vsel %vm549, %v227, 0.0
    %v614 = vsel %vm550, %v228, 0.0
    %v615 = vsel %vm551, %v229, 0.0
    %v616 = vsel %vm552, %v230, 0.0
    %v617 = vsel %vm553, %v231, 0.0
    %v618 = vsel %vm554, %v232, 0.0
    %v619 = vsel %vm555, %v233, 0.0
    %v620 = vsel %vm556, %v234, 0.0
    %v621 = vsel %vm557, %v235, 0.0
    %v622 = vsel %vm558, %v236, 0.0
    %v623 = vsel %vm559, %v237, 0.0
    %v624 = vsel %vm560, %v238, 0.0
    %v625 = vsel %vm561, %v239, 0.0
    %v626 = vsel %vm562, %v240, 0.0
    %v627 = vsel %vm563, %v241, 0.0
    %v628 = vsel %vm564, %v242, 0.0
    %v629 = vsel %vm565, %v243, 0.0
    %v630 = vsel %vm566, %v244, 0.0
    %v631 = vsel %vm567, %v245, 0.0
    %v632 = vsel %vm568, %v246, 0.0
    %v633 = vsel %vm569, %v247, 0.0
    %v634 = vsel %vm570, %v248, 0.0
    %v635 = vsel %vm571, %v249, 0.0
    %v636 = vsel %vm572, %v250, 0.0
    %v637 = vsel %vm573, %v251, 0.0
    %v638 = vsel %vm574, %v252, 0.0
    %v639 = vsel %vm575, %v253, 0.0
    %v640 = vsel %vm576, %v254, 0.0
    %v641 = vsel %vm577, %v255, 0.0
    %v642 = vsel %vm578, %v256, 0.0
    %v643 = vsel %vm579, %v257, 0.0
    %v644 = vsel %vm580, %v258, 0.0
    %v645 = vmul.f32 %v581, %v581
    %v646 = vmul.f32 %v582, %v582
    %v647 = vmul.f32 %v583, %v583
    %v648 = vmul.f32 %v584, %v584
    %v649 = vmul.f32 %v585, %v585
    %v650 = vmul.f32 %v586, %v586
    %v651 = vmul.f32 %v587, %v587
    %v652 = vmul.f32 %v588, %v588
    %v653 = vmul.f32 %v589, %v589
    %v654 = vmul.f32 %v590, %v590
    %v655 = vmul.f32 %v591, %v591
    %v656 = vmul.f32 %v592, %v592
    %v657 = vmul.f32 %v593, %v593
    %v658 = vmul.f32 %v594, %v594
    %v659 = vmul.f32 %v595, %v595
    %v660 = vmul.f32 %v596, %v596
    %v661 = vmul.f32 %v597, %v597
    %v662 = vmul.f32 %v598, %v598
    %v663 = vmul.f32 %v599, %v599
    %v664 = vmul.f32 %v600, %v600
    %v665 = vmul.f32 %v601, %v601
    %v666 = vmul.f32 %v602, %v602
    %v667 = vmul.f32 %v603, %v603
    %v668 = vmul.f32 %v604, %v604
    %v669 = vmul.f32 %v605, %v605
    %v670 = vmul.f32 %v606, %v606
    %v671 = vmul.f32 %v607, %v607
    %v672 = vmul.f32 %v608, %v608
    %v673 = vmul.f32 %v609, %v609
    %v674 = vmul.f32 %v610, %v610
    %v675 = vmul.f32 %v611, %v611
    %v676 = vmul.f32 %v612, %v612
    %v677 = vmul.f32 %v613, %v613
    %v678 = vmul.f32 %v614, %v614
    %v679 = vmul.f32 %v615, %v615
    %v680 = vmul.f32 %v616, %v616
    %v681 = vmul.f32 %v617, %v617
    %v682 = vmul.f32 %v618, %v618
    %v683 = vmul.f32 %v619, %v619
    %v684 = vmul.f32 %v620, %v620
    %v685 = vmul.f32 %v621, %v621
    %v686 = vmul.f32 %v622, %v622
    %v687 = vmul.f32 %v623, %v623
    %v688 = vmul.f32 %v624, %v624
    %v689 = vmul.f32 %v625, %v625
    %v690 = vmul.f32 %v626, %v626
    %v691 = vmul.f32 %v627, %v627
    %v692 = vmul.f32 %v628, %v628
    %v693 = vmul.f32 %v629, %v629
    %v694 = vmul.f32 %v630, %v630
    %v695 = vmul.f32 %v631, %v631
    %v696 = vmul.f32 %v632, %v632
    %v697 = vmul.f32 %v633, %v633
    %v698 = vmul.f32 %v634, %v634
    %v699 = vmul.f32 %v635, %v635
    %v700 = vmul.f32 %v636, %v636
    %v701 = vmul.f32 %v637, %v637
    %v702 = vmul.f32 %v638, %v638
    %v703 = vmul.f32 %v639, %v639
    %v704 = vmul.f32 %v640, %v640
    %v705 = vmul.f32 %v641, %v641
    %v706 = vmul.f32 %v642, %v642
    %v707 = vmul.f32 %v643, %v643
    %v708 = vmul.f32 %v644, %v644
    %v709 = vld [vmem:[#allocation7] sm:$0xff]
    %v710 = vadd.f32 %v645, %v646
    %v711 = vadd.f32 %v710, %v647
    %v712 = vadd.f32 %v711, %v648
    %v713 = vadd.f32 %v712, %v649
    %v714 = vadd.f32 %v713, %v650
    %v715 = vadd.f32 %v714, %v651
    %v716 = vadd.f32 %v715, %v652
    %v717 = vadd.f32 %v716, %v653
    %v718 = vadd.f32 %v717, %v654
    %v719 = vadd.f32 %v718, %v655
    %v720 = vadd.f32 %v719, %v656
    %v721 = vadd.f32 %v720, %v657
    %v722 = vadd.f32 %v721, %v658
    %v723 = vadd.f32 %v722, %v659
    %v724 = vadd.f32 %v723, %v660
    %v725 = vadd.f32 %v724, %v661
    %v726 = vadd.f32 %v725, %v662
    %v727 = vadd.f32 %v726, %v663
    %v728 = vadd.f32 %v727, %v664
    %v729 = vadd.f32 %v728, %v665
    %v730 = vadd.f32 %v729, %v666
    %v731 = vadd.f32 %v730, %v667
    %v732 = vadd.f32 %v731, %v668
    %v733 = vadd.f32 %v732, %v669
    %v734 = vadd.f32 %v733, %v670
    %v735 = vadd.f32 %v734, %v671
    %v736 = vadd.f32 %v735, %v672
    %v737 = vadd.f32 %v736, %v673
    %v738 = vadd.f32 %v737, %v674
    %v739 = vadd.f32 %v738, %v675
    %v740 = vadd.f32 %v739, %v676
    %v741 = vadd.f32 %v740, %v677
    %v742 = vadd.f32 %v741, %v678
    %v743 = vadd.f32 %v742, %v679
    %v744 = vadd.f32 %v743, %v680
    %v745 = vadd.f32 %v744, %v681
    %v746 = vadd.f32 %v745, %v682
    %v747 = vadd.f32 %v746, %v683
    %v748 = vadd.f32 %v747, %v684
    %v749 = vadd.f32 %v748, %v685
    %v750 = vadd.f32 %v749, %v686
    %v751 = vadd.f32 %v750, %v687
    %v752 = vadd.f32 %v751, %v688
    %v753 = vadd.f32 %v752, %v689
    %v754 = vadd.f32 %v753, %v690
    %v755 = vadd.f32 %v754, %v691
    %v756 = vadd.f32 %v755, %v692
    %v757 = vadd.f32 %v756, %v693
    %v758 = vadd.f32 %v757, %v694
    %v759 = vadd.f32 %v758, %v695
    %v760 = vadd.f32 %v759, %v696
    %v761 = vadd.f32 %v760, %v697
    %v762 = vadd.f32 %v761, %v698
    %v763 = vadd.f32 %v762, %v699
    %v764 = vadd.f32 %v763, %v700
    %v765 = vadd.f32 %v764, %v701
    %v766 = vadd.f32 %v765, %v702
    %v767 = vadd.f32 %v766, %v703
    %v768 = vadd.f32 %v767, %v704
    %v769 = vadd.f32 %v768, %v705
    %v770 = vadd.f32 %v769, %v706
    %v771 = vadd.f32 %v770, %v707
    %v772 = vadd.f32 %v771, %v708
    %v773 = vadd.f32 %v709, %v772
    %774 = vst [vmem:[#allocation7] sm:$0xff] %v773
    // Predicated region
    $region22: #{tpu_custom_call.1} parent=1 // pred_check
      _
    $region23: #{tpu_custom_call.1} parent=1 // pred_check_branch
      %776 = sbr.rel (0) target = $region25
    $region24: #{tpu_custom_call.1} parent=1 // pred_region
      %s778 = ssub.s32 128, 128
      %779 = vsyncadd [#allocation4], %s778
      %s781 = sshll.u32 [#allocation7], 4
      %s782 = int_to_ptr.vmem [resolvable:$true] %s781
      %784 = dma.vmem_to_hbm [thread:$0]  %s782, 128, %s2, [#allocation4]
    $region25: #{tpu_custom_call.1} parent=1 // pred_fallthru
      _
    // Predicated region
    $region26: #{tpu_custom_call.1} parent=1 // pred_check
      _
    $region27: #{tpu_custom_call.1} parent=1 // pred_check_branch
      %786 = sbr.rel (0) target = $region29
    $region28: #{tpu_custom_call.1} parent=1 // pred_region
      %787 = dma.done [#allocation4], 128
    $region29: #{tpu_custom_call.1} parent=1 // pred_fallthru
      _
    %788 = vsyncpa [#allocation3], 1
    %789 = vsyncpa [#allocation6], 1
    %790 = vsyncpa [#allocation4], 1

</llo_original>
